<compile_context>
chip_gen: v5e
topology: v5e:2x2
jax: 0.10.0
libtpu: 0.0.40
codegen_flags: <defaults>
</compile_context>

<pallas_src>
import functools

import jax
import jax.numpy as jnp
from jax.experimental import pallas as pl
from jax.experimental.pallas import tpu as pltpu


def _psnr_kernel(x_ref, y_ref, out_ref, acc_ref, *, tile_rows, total_d,
                 data_range, epsilon):
    """Grid = (batch, feature_chunks). Accumulates sum of squared differences
    into an (8, 128) f32 accumulator; finalizes to PSNR (dB) on the last chunk."""
    k = pl.program_id(1)

    @pl.when(k == 0)
    def _():
        acc_ref[...] = jnp.zeros_like(acc_ref)

    # x_ref / y_ref blocks are (1, tile_rows, 128).
    d = x_ref[0].astype(jnp.float32) - y_ref[0].astype(jnp.float32)
    sq = d * d
    # Fold groups of 8 rows onto the (8, 128) accumulator: pure elementwise VPU
    # adds every step; no cross-lane reduction in the hot loop.
    acc_ref[...] += sq.reshape(tile_rows // 8, 8, 128).sum(axis=0)

    @pl.when(k == pl.num_programs(1) - 1)
    def _():
        # One cross-lane/sublane reduction per image, only on the final step.
        ssd = jnp.sum(acc_ref[...])
        m = ssd / jnp.float32(total_d)
        val = 10.0 * jnp.log10(
            jnp.float32(data_range) ** 2 / (m + jnp.float32(epsilon))
        )
        out_ref[...] = jnp.full(out_ref.shape, val, dtype=jnp.float32)


def psnr_pallas(X, Y, *, data_range=1.0, epsilon=1e-8, reduction="mean"):
    if X.shape != Y.shape:
        raise ValueError(f"Input images should have the same dimensions, "
                         f"but got {X.shape} and {Y.shape}.")
    if X.ndim != 4:
        raise ValueError(f"Input images should be 4-d tensors, but got {X.shape}")
    if X.dtype != Y.dtype:
        raise ValueError(f"Input images should have the same dtype, "
                         f"but got {X.dtype} and {Y.dtype}.")
    # TODO(synk): PyTorch's runtime min/max range checks are host-side value
    # checks and are intentionally omitted from the device kernel.

    B = X.shape[0]
    D = 1
    for s in X.shape[1:]:
        D *= s

    itemsize = jnp.dtype(X.dtype).itemsize

    # --- tile sizing (VMEM-budget driven) -----------------------------------
    # Each input block is (tile_rows, 128) * itemsize bytes; with 2 inputs and
    # 2 pipeline buffers each, keep total pipelined input traffic <= ~8 MiB,
    # which is comfortably inside v7x's 32 MiB default-scoped VMEM while being
    # large enough to amortize the ~0.35 us per-grid-step overhead.
    per_block_budget = 2 * 1024 * 1024  # bytes per input block
    tr_max = max(8, (per_block_budget // (128 * itemsize)) // 8 * 8)

    r = pl.cdiv(D, 128)                       # rows of 128 lanes per image
    r_rounded = ((r + 7) // 8) * 8            # multiple of 8 sublanes
    tile_rows = min(r_rounded, tr_max)        # multiple of 8 by construction
    r_pad = ((r_rounded + tile_rows - 1) // tile_rows) * tile_rows
    d_pad = r_pad * 128
    num_chunks = r_pad // tile_rows

    # --- layout: (B, D) -> zero-pad -> (B, r_pad, 128) ----------------------
    x2 = X.reshape(B, D)
    y2 = Y.reshape(B, D)
    if d_pad != D:
        pad = d_pad - D
        x2 = jnp.pad(x2, ((0, 0), (0, pad)))   # zero padding: diff = 0, no
        y2 = jnp.pad(y2, ((0, 0), (0, pad)))   # contribution to the SSD
    x3 = x2.reshape(B, r_pad, 128)
    y3 = y2.reshape(B, r_pad, 128)

    kernel = functools.partial(
        _psnr_kernel,
        tile_rows=tile_rows,
        total_d=D,
        data_range=data_range,
        epsilon=epsilon,
    )

    per_image = pl.pallas_call(
        kernel,
        out_shape=jax.ShapeDtypeStruct((B, 1, 128), jnp.float32),
        grid_spec=pltpu.PrefetchScalarGridSpec(
            num_scalar_prefetch=0,
            grid=(B, num_chunks),
            in_specs=[
                pl.BlockSpec((1, tile_rows, 128), lambda b, k: (b, k, 0)),
                pl.BlockSpec((1, tile_rows, 128), lambda b, k: (b, k, 0)),
            ],
            out_specs=pl.BlockSpec((1, 1, 128), lambda b, k: (b, 0, 0)),
            scratch_shapes=[pltpu.VMEM((8, 128), jnp.float32)],
        ),
        compiler_params=pltpu.CompilerParams(
            # batch axis parallel -> both v7x TensorCores; reduction axis arbitrary.
            dimension_semantics=("parallel", "arbitrary"),
            vmem_limit_bytes=32 * 1024 * 1024,
        ),
    )(x3, y3)

    result = per_image[:, 0, 0]  # shape (B,), float32 — matches torch psnr()

    if reduction == "mean":
        return result.mean()
    elif reduction == "sum":
        return result.sum()
    elif reduction == "none":
        return result
    else:
        raise ValueError(f"Invalid reduction: {reduction}")


def _psnr_ref(X, Y, data_range=1.0, epsilon=1e-8, reduction="mean"):
    B = X.shape[0]
    d = X.astype(jnp.float32) - Y.astype(jnp.float32)
    m = (d * d).reshape(B, -1).mean(axis=-1)
    r = 10.0 * jnp.log10(data_range**2 / (m + epsilon))
    if reduction == "mean":
        return r.mean()
    if reduction == "sum":
        return r.sum()
    return r


if __name__ == "__main__":
    key = jax.random.PRNGKey(0)
    kx, ky = jax.random.split(key)
    shape = (2, 4, 16, 16)  # NCHW
    X = jax.random.uniform(kx, shape, dtype=jnp.float32)
    Y = jnp.clip(X + 0.05 * jax.random.normal(ky, shape, dtype=jnp.float32), 0.0, 1.0)

    out = psnr_pallas(X, Y, data_range=1.0, epsilon=1e-8, reduction="mean")
    out = jax.block_until_ready(out)

    ref = _psnr_ref(X, Y)
    assert jnp.allclose(out, ref, rtol=1e-4, atol=1e-4), (out, ref)

    # Also check per-image ("none") and "sum" reductions.
    out_none = jax.block_until_ready(psnr_pallas(X, Y, reduction="none"))
    ref_none = _psnr_ref(X, Y, reduction="none")
    assert jnp.allclose(out_none, ref_none, rtol=1e-4, atol=1e-4), (out_none, ref_none)

    print("KERNEL_OK")
</pallas_src>

<mosaic_0001>
module attributes {stable_mosaic.version = 11 : i64} {
  func.func @_psnr_kernel(%arg0: i32, %arg1: i32, %arg2: memref<1x8x128xf32, #tpu.memory_space<vmem>>, %arg3: memref<1x8x128xf32, #tpu.memory_space<vmem>>, %arg4: memref<1x1x128xf32, #tpu.memory_space<vmem>>, %arg5: memref<8x128xf32, #tpu.memory_space<vmem>>) attributes {dimension_semantics = [#tpu.dimension_semantics<parallel>, #tpu.dimension_semantics<arbitrary>], iteration_bounds = array<i64: 2, 1>, scalar_prefetch = 0 : i64, scratch_operands = 1 : i64, tpu.core_type = #tpu.core_type<tc>, window_params = [{transform_indices = @transform_0, window_bounds = array<i64: 1, 8, 128>}, {transform_indices = @transform_1, window_bounds = array<i64: 1, 8, 128>}, {transform_indices = @transform_2, window_bounds = array<i64: 1, 1, 128>}]} {
    %c0_i32 = arith.constant 0 : i32
    %0 = arith.cmpi eq, %arg1, %c0_i32 : i32
    %1 = arith.extui %0 : i1 to i32
    %c0_i32_0 = arith.constant 0 : i32
    %2 = arith.cmpi ne, %1, %c0_i32_0 : i32
    scf.if %2 {
      %cst_12 = arith.constant 0.000000e+00 : f32
      %17 = vector.broadcast %cst_12 : f32 to vector<8x128xf32>
      %c0_13 = arith.constant 0 : index
      %c0_14 = arith.constant 0 : index
      %18 = vector.load %arg5[%c0_13, %c0_14] : memref<8x128xf32, #tpu.memory_space<vmem>>, vector<8x128xf32>
      tpu.vector_store %arg5[%c0_13, %c0_14], %17 {strides = array<i32>} : memref<8x128xf32, #tpu.memory_space<vmem>>, vector<8x128xf32>,
    } else {
    }
    %c0 = arith.constant 0 : index
    %c0_1 = arith.constant 0 : index
    %c0_2 = arith.constant 0 : index
    %3 = vector.load %arg2[%c0, %c0_1, %c0_2] : memref<1x8x128xf32, #tpu.memory_space<vmem>>, vector<1x8x128xf32>
    %4 = vector.shape_cast %3 : vector<1x8x128xf32> to vector<8x128xf32>
    %c0_3 = arith.constant 0 : index
    %c0_4 = arith.constant 0 : index
    %c0_5 = arith.constant 0 : index
    %5 = vector.load %arg3[%c0_3, %c0_4, %c0_5] : memref<1x8x128xf32, #tpu.memory_space<vmem>>, vector<1x8x128xf32>
    %6 = vector.shape_cast %5 : vector<1x8x128xf32> to vector<8x128xf32>
    %7 = arith.subf %4, %6 : vector<8x128xf32>
    %8 = arith.mulf %7, %7 : vector<8x128xf32>
    %c0_6 = arith.constant 0 : index
    %c0_7 = arith.constant 0 : index
    %9 = vector.load %arg5[%c0_6, %c0_7] : memref<8x128xf32, #tpu.memory_space<vmem>>, vector<8x128xf32>
    %10 = vector.shape_cast %8 : vector<8x128xf32> to vector<1x8x128xf32>
    %cst = arith.constant dense<0.000000e+00> : vector<8x128xf32>
    %11 = vector.multi_reduction <add>, %10, %cst [0] : vector<1x8x128xf32> to vector<8x128xf32>
    %12 = arith.addf %9, %11 : vector<8x128xf32>
    %c0_8 = arith.constant 0 : index
    %c0_9 = arith.constant 0 : index
    %13 = vector.load %arg5[%c0_8, %c0_9] : memref<8x128xf32, #tpu.memory_space<vmem>>, vector<8x128xf32>
    tpu.vector_store %arg5[%c0_8, %c0_9], %12 {strides = array<i32>} : memref<8x128xf32, #tpu.memory_space<vmem>>, vector<8x128xf32>,
    %c0_i32_10 = arith.constant 0 : i32
    %14 = arith.cmpi eq, %arg1, %c0_i32_10 : i32
    %15 = arith.extui %14 : i1 to i32
    %c0_i32_11 = arith.constant 0 : i32
    %16 = arith.cmpi ne, %15, %c0_i32_11 : i32
    scf.if %16 {
      %c0_12 = arith.constant 0 : index
      %c0_13 = arith.constant 0 : index
      %17 = vector.load %arg5[%c0_12, %c0_13] : memref<8x128xf32, #tpu.memory_space<vmem>>, vector<8x128xf32>
      %18 = vector.shape_cast %17 : vector<8x128xf32> to vector<1x8x128xf32>
      %cst_14 = arith.constant dense<0.000000e+00> : vector<1xf32>
      %19 = vector.multi_reduction <add>, %18, %cst_14 [1, 2] : vector<1x8x128xf32> to vector<1xf32>
      %20 = vector.shape_cast %19 : vector<1xf32> to vector<1x1x1xf32>
      %21 = vector.extract %20[0, 0, 0] : f32 from vector<1x1x1xf32>
      %cst_15 = arith.constant 1.024000e+03 : f32
      %22 = arith.divf %21, %cst_15 : f32
      %cst_16 = arith.constant 1.000000e+00 : f32
      %23 = arith.mulf %cst_16, %cst_16 : f32
      %cst_17 = arith.constant 9.99999993E-9 : f32
      %24 = arith.addf %22, %cst_17 : f32
      %25 = arith.divf %23, %24 : f32
      %26 = math.log %25 : f32
      %cst_18 = arith.constant 0.434294492 : f32
      %27 = arith.mulf %26, %cst_18 : f32
      %cst_19 = arith.constant 1.000000e+01 : f32
      %28 = arith.mulf %cst_19, %27 : f32
      %29 = vector.broadcast %28 : f32 to vector<1x1x128xf32>
      %c0_20 = arith.constant 0 : index
      %c0_21 = arith.constant 0 : index
      %c0_22 = arith.constant 0 : index
      %30 = vector.load %arg4[%c0_20, %c0_21, %c0_22] : memref<1x1x128xf32, #tpu.memory_space<vmem>>, vector<1x1x128xf32>
      tpu.vector_store %arg4[%c0_20, %c0_21, %c0_22], %29 {strides = array<i32>} : memref<1x1x128xf32, #tpu.memory_space<vmem>>, vector<1x1x128xf32>,
    } else {
    }
    return
  }
  func.func @transform_0(%arg0: i32, %arg1: i32) -> (i32, i32, i32) {
    %c0_i32 = arith.constant 0 : i32
    %c0_i32_0 = arith.constant 0 : i32
    return %arg0, %arg1, %c0_i32 : i32, i32, i32
  }
  func.func @transform_1(%arg0: i32, %arg1: i32) -> (i32, i32, i32) {
    %c0_i32 = arith.constant 0 : i32
    %c0_i32_0 = arith.constant 0 : i32
    return %arg0, %arg1, %c0_i32 : i32, i32, i32
  }
  func.func @transform_2(%arg0: i32, %arg1: i32) -> (i32, i32, i32) {
    %c0_i32 = arith.constant 0 : i32
    %c0_i32_0 = arith.constant 0 : i32
    %c0_i32_1 = arith.constant 0 : i32
    return %arg0, %c0_i32, %c0_i32_0 : i32, i32, i32
  }
}

</mosaic_0001>

<llo_original>
// kernel: tpu_custom_call.1
$region0: #{tpu_custom_call.1}
  #allocation0 [shape = 'u32[]', space=smem, size = 0x4, offset = 0x4, fixed_abs, tag = 'smem constant byte address 0x4 - core index']
  #allocation1 [shape = 'u32[72,128]{1,0:T(1,128)}', space=vmem, size = 0x9000, scoped, tag = 'internal scratch']
  #allocation2 [shape = 'f32[8,128]{1,0:T(8,128)}', space=vmem, size = 0x1000, scoped, tag = 'scratch operand']
  %s0 = inlined_call_operand.hbm [shape: f32[2,8,128], index: 0, kind: input, shape index: {}]
  %s1 = inlined_call_operand.hbm [shape: f32[2,8,128], index: 1, kind: input, shape index: {}]
  %s2 = inlined_call_operand.hbm [shape: f32[2,1,128], index: 2, kind: output, shape index: {}]
  %s3 = sld [smem:[#allocation0]]
  $region57: #{tpu_custom_call.1} parent=0
    _
  %s5 = ssub.s32 1, %s3
  %s6 = scalar_select 0, %s5, %s3
  $region1: #{tpu_custom_call.1} parent=0
    #allocation3 [shape = 'u8[8192]{0}', space=vmem, size = 0x2000, scoped, tag = 'input window, operand 0']
    #allocation4 [shape = 's32[2]{0}', space=sflag, size = 0x8, scoped, tag = 'scoped memory for tpu_custom_call.1']
    #allocation5 [shape = 's32[2]{0}', space=sflag, size = 0x8, scoped, tag = 'scoped memory for tpu_custom_call.1']
    #allocation6 [shape = 'u8[8192]{0}', space=vmem, size = 0x2000, scoped, tag = 'input window, operand 1']
    #allocation7 [shape = 's32[2]{0}', space=sflag, size = 0x8, scoped, tag = 'scoped memory for tpu_custom_call.1']
    #allocation8 [shape = 'u8[1024]{0}', space=vmem, size = 0x400, scoped, tag = 'output window, operand 0']
    %7 = vsyncpa [#allocation4], 0
    %s8 = scalar_lea.sflag [#allocation4], 1
    %9 = vsyncpa %s8, 0
    %10 = vsyncpa [#allocation7], 0
    %s11 = scalar_lea.sflag [#allocation7], 1
    %12 = vsyncpa %s11, 0
    %13 = vsyncpa [#allocation5], 0
    %s14 = scalar_lea.sflag [#allocation5], 1
    %15 = vsyncpa %s14, 0
    loop: start=0, step=1, limit=4
    $region2: #{tpu_custom_call.1} parent=1 // loop_pre_header
      _
    $region3: #{tpu_custom_call.1} parent=1 // loop_header
      %s17 = sphi 0, %s21
      %p18 = scmp.ge.s32.totalorder %s17, 4
      %s24 = sphi 0, %s36
      %s25 = sphi 0, %s32
      %s26 = sphi 0, %s24
      %s27 = sphi 0, %s25
      %s28 = sphi 0, %s26
      %s29 = sphi 0, %s27
      %s41 = sphi 0, %s43
      %s44 = sphi 0, %s41
      %s45 = sphi 0, %s44
      %s61 = sphi 0, %s45
      %s69 = sphi 0, %s71
      %s72 = sphi 0, %s69
      %s73 = sphi 0, %s72
      %s89 = sphi 0, %s73
      %s95 = sphi 0, %s97
      %s98 = sphi 0, %s95
      %s99 = sphi 0, %s98
      %s115 = sphi 0, %s99
    $region4: #{tpu_custom_call.1} parent=1 // loop_header_branch
      %20 = sbr.rel (%p18) target = $region8
    $region5: #{tpu_custom_call.1} parent=1 // loop_body
      %s22 = ssub.s32 %s17, 1
      %s23 = ssub.s32 %s17, 2
      %s30 = sadd.s32 1, %s25
      %p31 = scmp.ge.s32.totalorder %s30, 1
      %s32 = scalar_select %p31, 0, %s30
      %s33 = sadd.s32 1, %s24
      %s34 = scalar_select %p31, %s33, %s24
      %p35 = scmp.ge.s32.totalorder %s34, 2
      %s36 = scalar_select %p35, 0, %s34
      %s37 = ssub.s32 %s24, %s36
      %s38 = ssub.s32 %s25, %s32
      %s39 = sor.u32 %s37, %s38
      %p40 = scmp.eq.s32.totalorder %s39, 0
      %s42 = sadd.s32 %s41, 1
      %s43 = scalar_select %p40, %s41, %s42
      %p46 = pneg %p40
      %p47 = scmp.eq.s32.totalorder %s17, 1
      %p48 = por %p46, %p47
      %p49 = scmp.ne.s32.totalorder %s41, %s44
      %p50 = scmp.eq.s32.totalorder %s17, 0
      %p51 = por %p49, %p50
      %p52 = scmp.ne.s32.totalorder %s41, %s44
      %p53 = scmp.eq.s32.totalorder %s22, 1
      %p54 = por %p52, %p53
      %p55 = scmp.ne.s32.totalorder %s44, %s45
      %p56 = scmp.eq.s32.totalorder %s22, 0
      %p57 = por %p55, %p56
      %p58 = scmp.ne.s32.totalorder %s44, %s45
      %p59 = scmp.eq.s32.totalorder %s23, 1
      %p60 = por %p58, %p59
      %p62 = scmp.ne.s32.totalorder %s45, %s61
      %p63 = scmp.eq.s32.totalorder %s23, 0
      %p64 = por %p62, %p63
      %s65 = ssub.s32 %s24, %s36
      %s66 = ssub.s32 %s25, %s32
      %s67 = sor.u32 %s65, %s66
      %p68 = scmp.eq.s32.totalorder %s67, 0
      %s70 = sadd.s32 %s69, 1
      %s71 = scalar_select %p68, %s69, %s70
      %p74 = pneg %p68
      %p75 = scmp.eq.s32.totalorder %s17, 1
      %p76 = por %p74, %p75
      %p77 = scmp.ne.s32.totalorder %s69, %s72
      %p78 = scmp.eq.s32.totalorder %s17, 0
      %p79 = por %p77, %p78
      %p80 = scmp.ne.s32.totalorder %s69, %s72
      %p81 = scmp.eq.s32.totalorder %s22, 1
      %p82 = por %p80, %p81
      %p83 = scmp.ne.s32.totalorder %s72, %s73
      %p84 = scmp.eq.s32.totalorder %s22, 0
      %p85 = por %p83, %p84
      %p86 = scmp.ne.s32.totalorder %s72, %s73
      %p87 = scmp.eq.s32.totalorder %s23, 1
      %p88 = por %p86, %p87
      %p90 = scmp.ne.s32.totalorder %s73, %s89
      %p91 = scmp.eq.s32.totalorder %s23, 0
      %p92 = por %p90, %p91
      %s93 = ssub.s32 %s24, %s36
      %p94 = scmp.eq.s32.totalorder %s93, 0
      %s96 = sadd.s32 %s95, 1
      %s97 = scalar_select %p94, %s95, %s96
      %p100 = pneg %p94
      %p101 = scmp.eq.s32.totalorder %s17, 1
      %p102 = por %p100, %p101
      %p103 = scmp.ne.s32.totalorder %s95, %s98
      %p104 = scmp.eq.s32.totalorder %s17, 0
      %p105 = por %p103, %p104
      %p106 = scmp.ne.s32.totalorder %s95, %s98
      %p107 = scmp.eq.s32.totalorder %s22, 1
      %p108 = por %p106, %p107
      %p109 = scmp.ne.s32.totalorder %s98, %s99
      %p110 = scmp.eq.s32.totalorder %s22, 0
      %p111 = por %p109, %p110
      %p112 = scmp.ne.s32.totalorder %s98, %s99
      %p113 = scmp.eq.s32.totalorder %s23, 1
      %p114 = por %p112, %p113
      %p116 = scmp.ne.s32.totalorder %s99, %s115
      %p117 = scmp.eq.s32.totalorder %s23, 0
      %p118 = por %p116, %p117
      %p119 = scmp.le.s32.totalorder 1, %s17
      %p120 = scmp.lt.s32.totalorder %s17, 3
      %p121 = pnand %p119, %p120
      %p122 = pneg %p121
      // Predicated region
      $region9: #{tpu_custom_call.1} parent=5 // pred_check
        _
      $region10: #{tpu_custom_call.1} parent=5 // pred_check_branch
        %124 = sbr.rel (%p121) target = $region12
      $region11: #{tpu_custom_call.1} parent=5 // pred_region
        %s125 = ssub.s32 %s17, 1
      $region12: #{tpu_custom_call.1} parent=5 // pred_fallthru
        _
      %p126 = scmp.lt.s32.totalorder %s17, 2
      // Predicated region
      $region13: #{tpu_custom_call.1} parent=5 // pred_check
        %p127 = pneg %p126
      $region14: #{tpu_custom_call.1} parent=5 // pred_check_branch
        %129 = sbr.rel (%p127) target = $region16
      $region15: #{tpu_custom_call.1} parent=5 // pred_region
        // Predicated region
        $region17: #{tpu_custom_call.1} parent=15 // pred_check
          %p130 = pneg %p51
        $region18: #{tpu_custom_call.1} parent=15 // pred_check_branch
          %132 = sbr.rel (%p130) target = $region20
        $region19: #{tpu_custom_call.1} parent=15 // pred_region
          %s133 = sand.u32 %s41, 1
          %s134 = scalar_lea.sflag [#allocation4], %s133
          %s135 = sand.u32 %s41, 1
          %s136 = smul.addr %s135, 8
          %s137 = scalar_lea.vmem [#allocation3], %s136
          %139 = vsyncadd %s134, 0
          %s140 = sadd.s32 %s25, %s24
          %s141 = smul.addr %s140, 8
          %s142 = scalar_lea.hbm %s0, %s141
          %s144 = sshll.u32 %s142, 4
          %s145 = int_to_ptr.hbm [resolvable:$true] %s144
          %s146 = sshll.u32 %s137, 4
          %s147 = int_to_ptr.vmem [resolvable:$true] %s146
          %149 = dma.hbm_to_vmem [thread:$0]  %s145, 128, %s147, %s134
        $region20: #{tpu_custom_call.1} parent=15 // pred_fallthru
          _
        // Predicated region
        $region21: #{tpu_custom_call.1} parent=15 // pred_check
          %p150 = pneg %p79
        $region22: #{tpu_custom_call.1} parent=15 // pred_check_branch
          %152 = sbr.rel (%p150) target = $region24
        $region23: #{tpu_custom_call.1} parent=15 // pred_region
          %s153 = sand.u32 %s69, 1
          %s154 = scalar_lea.sflag [#allocation7], %s153
          %s155 = sand.u32 %s69, 1
          %s156 = smul.addr %s155, 8
          %s157 = scalar_lea.vmem [#allocation6], %s156
          %159 = vsyncadd %s154, 0
          %s160 = sadd.s32 %s25, %s24
          %s161 = smul.addr %s160, 8
          %s162 = scalar_lea.hbm %s1, %s161
          %s164 = sshll.u32 %s162, 4
          %s165 = int_to_ptr.hbm [resolvable:$true] %s164
          %s166 = sshll.u32 %s157, 4
          %s167 = int_to_ptr.vmem [resolvable:$true] %s166
          %169 = dma.hbm_to_vmem [thread:$0]  %s165, 128, %s167, %s154
        $region24: #{tpu_custom_call.1} parent=15 // pred_fallthru
          _
      $region16: #{tpu_custom_call.1} parent=5 // pred_fallthru
        _
      %p170 = scmp.le.s32.totalorder 1, %s17
      %p171 = scmp.lt.s32.totalorder %s17, 3
      %p172 = pnand %p170, %p171
      %p173 = pneg %p172
      // Predicated region
      $region25: #{tpu_custom_call.1} parent=5 // pred_check
        _
      $region26: #{tpu_custom_call.1} parent=5 // pred_check_branch
        %175 = sbr.rel (%p172) target = $region28
      $region27: #{tpu_custom_call.1} parent=5 // pred_region
        %s176 = ssub.s32 %s17, 1
        %s177 = sand.u32 %s44, 1
        %s178 = scalar_lea.sflag [#allocation4], %s177
        %s179 = sand.u32 %s44, 1
        %s180 = smul.addr %s179, 8
        %s181 = scalar_lea.vmem [#allocation3], %s180
        // Predicated region
        $region29: #{tpu_custom_call.1} parent=27 // pred_check
          %p182 = pneg %p57
        $region30: #{tpu_custom_call.1} parent=27 // pred_check_branch
          %184 = sbr.rel (%p182) target = $region32
        $region31: #{tpu_custom_call.1} parent=27 // pred_region
          %186 = dma.done %s178, 128
        $region32: #{tpu_custom_call.1} parent=27 // pred_fallthru
          _
        %s187 = sand.u32 %s72, 1
        %s188 = scalar_lea.sflag [#allocation7], %s187
        %s189 = sand.u32 %s72, 1
        %s190 = smul.addr %s189, 8
        %s191 = scalar_lea.vmem [#allocation6], %s190
        // Predicated region
        $region33: #{tpu_custom_call.1} parent=27 // pred_check
          %p192 = pneg %p85
        $region34: #{tpu_custom_call.1} parent=27 // pred_check_branch
          %194 = sbr.rel (%p192) target = $region36
        $region35: #{tpu_custom_call.1} parent=27 // pred_region
          %196 = dma.done %s188, 128
        $region36: #{tpu_custom_call.1} parent=27 // pred_fallthru
          _
        %s197 = sand.u32 %s44, 1
        %s198 = scalar_lea.sflag [#allocation4], %s197
        %s199 = sand.u32 %s44, 1
        %s200 = smul.addr %s199, 8
        %s201 = scalar_lea.vmem [#allocation3], %s200
        %p202 = pneg %p57
        %p203 = pneg %p54
        %s204 = sand.u32 %s72, 1
        %s205 = scalar_lea.sflag [#allocation7], %s204
        %s206 = sand.u32 %s72, 1
        %s207 = smul.addr %s206, 8
        %s208 = scalar_lea.vmem [#allocation6], %s207
        %p209 = pneg %p85
        %p210 = pneg %p82
        %p211 = pneg %p111
        %p212 = pneg %p108
        %s213 = sand.u32 %s98, 1
        %s214 = scalar_lea.sflag [#allocation5], %s213
        %s215 = sand.u32 %s98, 1
        %s216 = scalar_lea.vmem [#allocation8], %s215
        %p217 = scmp.eq.s32.totalorder %s27, 0
        // Predicated region
        $region37: #{tpu_custom_call.1} parent=27 // pred_check
          %p218 = pneg %p217
        $region38: #{tpu_custom_call.1} parent=27 // pred_check_branch
          %220 = sbr.rel (%p218) target = $region40
        $region39: #{tpu_custom_call.1} parent=27 // pred_region
          %221 = vst [vmem:[#allocation2] sm:$0xff] 0.0
        $region40: #{tpu_custom_call.1} parent=27 // pred_fallthru
          _
        %v222 = vld [vmem:[%s181] sm:$0xff]
        %v223 = vld [vmem:[%s191] sm:$0xff]
        %v224 = vsub.f32 %v222, %v223
        %v225 = vmul.f32 %v224, %v224
        %v226 = vld [vmem:[#allocation2] sm:$0xff]
        %v227 = vadd.f32 %v225, 0.0
        %v228 = vadd.f32 %v226, %v227
        %229 = vst [vmem:[#allocation2] sm:$0xff] %v228
        // Predicated region
        $region41: #{tpu_custom_call.1} parent=27 // pred_check
          %p230 = pneg %p217
        $region42: #{tpu_custom_call.1} parent=27 // pred_check_branch
          %232 = sbr.rel (%p230) target = $region44
        $region43: #{tpu_custom_call.1} parent=27 // pred_region
          %v233 = vld [vmem:[#allocation2] sm:$0xff]
          %234 = vadd.xlane.f32.xlu0 %v233
          %v235 = vpop.xlane.xlu0 %234
          %v236 = vrot.slane %v235, 4
          %v237 = vadd.f32 %v235, %v236
          %v238 = vrot.slane %v237, 2
          %v239 = vadd.f32 %v237, %v238
          %v240 = vrot.slane %v239, 1
          %v241 = vadd.f32 %v239, %v240
          %s242 = vtos %v241
          %v243 = vrcp.pop 1024.0
          %v244 = vmul.f32 1024.0, %v243
          %v245 = vsub.f32 1.0, %v244
          %v246 = vmul.f32 %v243, %v245
          %v247 = vadd.f32 %v243, %v246
          %vm248 = vweird.f32 %v243
          %v249 = vsel %vm248, %v243, %v247
          %s250 = vtos %v249
          %s251 = smul.f32 %s242, %s250
          %s252 = sadd.f32 %s251, 1e-08
          %v253 = vstv %s252
          %v254 = vrcp.pop %v253
          %v255 = vmul.f32 %v253, %v254
          %v256 = vsub.f32 1.0, %v255
          %v257 = vmul.f32 %v254, %v256
          %v258 = vadd.f32 %v254, %v257
          %vm259 = vweird.f32 %v253
          %vm260 = vweird.f32 %v254
          %vm261 = vmor %vm259, %vm260
          %v262 = vsel %vm261, %v254, %v258
          %v263 = vand.u32 2147483647, %v253
          %vm264 = vcmp.eq.f32.partialorder %v263, 8.507059e+37
          %v265 = vand.u32 %v253, 2147483648
          %v266 = vor.u32 1.1754944e-38, %v265
          %v267 = vsel %vm264, %v266, %v262
          %s268 = vtos %v267
          %v269 = vstv %s268
          %v270 = vlog2.pop %v269
          %v271 = vmul.f32 %v270, 0.6931472
          %s272 = vtos %v271
          %s273 = smul.f32 %s272, 0.4342945
          %s274 = smul.f32 %s273, 10.0
          %v275 = vstv %s274
          %276 = vst [vmem:[%s216] sm:$0x1] %v275
        $region44: #{tpu_custom_call.1} parent=27 // pred_fallthru
          _
        %s277 = sand.u32 %s98, 1
        %s278 = scalar_lea.sflag [#allocation5], %s277
        %s279 = sand.u32 %s98, 1
        %s280 = scalar_lea.vmem [#allocation8], %s279
        // Predicated region
        $region45: #{tpu_custom_call.1} parent=27 // pred_check
          %p281 = pneg %p108
        $region46: #{tpu_custom_call.1} parent=27 // pred_check_branch
          %283 = sbr.rel (%p281) target = $region48
        $region47: #{tpu_custom_call.1} parent=27 // pred_region
          %285 = vsyncadd %s278, 0
          %s286 = scalar_lea.hbm %s2, %s26
          %s288 = sshll.u32 %s280, 4
          %s289 = int_to_ptr.vmem [resolvable:$true] %s288
          %s290 = sshll.u32 %s286, 4
          %s291 = int_to_ptr.hbm [resolvable:$true] %s290
          %293 = dma.vmem_to_hbm [thread:$0]  %s289, 16, %s291, %s278
        $region48: #{tpu_custom_call.1} parent=27 // pred_fallthru
          _
      $region28: #{tpu_custom_call.1} parent=5 // pred_fallthru
        _
      %p294 = scmp.le.s32.totalorder 2, %s17
      // Predicated region
      $region49: #{tpu_custom_call.1} parent=5 // pred_check
        %p295 = pneg %p294
      $region50: #{tpu_custom_call.1} parent=5 // pred_check_branch
        %297 = sbr.rel (%p295) target = $region52
      $region51: #{tpu_custom_call.1} parent=5 // pred_region
        %s298 = ssub.s32 %s17, 2
        // Predicated region
        $region53: #{tpu_custom_call.1} parent=51 // pred_check
          %p299 = pneg %p114
        $region54: #{tpu_custom_call.1} parent=51 // pred_check_branch
          %301 = sbr.rel (%p299) target = $region56
        $region55: #{tpu_custom_call.1} parent=51 // pred_region
          %s302 = sand.u32 %s99, 1
          %s303 = scalar_lea.sflag [#allocation5], %s302
          %s304 = sand.u32 %s99, 1
          %s305 = scalar_lea.vmem [#allocation8], %s304
          %307 = dma.done %s303, 16
        $region56: #{tpu_custom_call.1} parent=51 // pred_fallthru
          _
      $region52: #{tpu_custom_call.1} parent=5 // pred_fallthru
        _
    $region6: #{tpu_custom_call.1} parent=1 // loop_footer
      %s21 = sadd.s32 1, %s17
    $region7: #{tpu_custom_call.1} parent=1 // loop_footer_branch
      %16 = sbr.rel target = $region3
    $region8: #{tpu_custom_call.1} parent=1 // loop_exit
      _
    %308 = vsyncpa [#allocation4], 1
    %s309 = scalar_lea.sflag [#allocation4], 1
    %310 = vsyncpa %s309, 1
    %311 = vsyncpa [#allocation7], 1
    %s312 = scalar_lea.sflag [#allocation7], 1
    %313 = vsyncpa %s312, 1
    %314 = vsyncpa [#allocation5], 1
    %s315 = scalar_lea.sflag [#allocation5], 1
    %316 = vsyncpa %s315, 1

</llo_original>
